<compile_context>
chip_gen: v5e
topology: v5e:2x2
jax: 0.10.0
libtpu: 0.0.40
codegen_flags: <defaults>
</compile_context>

<pallas_src>
import functools

import jax
import jax.numpy as jnp
from jax.experimental import pallas as pl
from jax.experimental.pallas import tpu as pltpu


def _round_up(x, m):
    return ((x + m - 1) // m) * m


def _device_kind():
    try:
        return jax.devices()[0].device_kind.lower()
    except Exception:
        return ""


def _num_tensorcores():
    # v7x exposes 2 TensorCores per chip; v5e/v6e have 1.
    kind = _device_kind()
    if "v7" in kind or "7x" in kind:
        return 2
    return 1


def _default_tanh_dtype():
    # v5e's EUP has no bf16 path -> keep tanh in f32 there; bf16 on v6e/v7x.
    kind = _device_kind()
    if "v5" in kind:
        return jnp.float32
    return jnp.bfloat16


# --------------------------------------------------------------------------
# kernel
# --------------------------------------------------------------------------
def _policy_kernel(x_ref, w1_ref, b1_ref, w2_ref, b2_ref, w3_ref, b3_ref,
                   out_ref, *, n_action, compute_dtype, tanh_dtype):
    x = x_ref[...].astype(compute_dtype)                        # (TB, OBS)

    # layer 1: actor+critic fused along the (lane-padded) output axis -> (TB, 128)
    h = jnp.dot(x, w1_ref[...], preferred_element_type=jnp.float32) + b1_ref[...]
    h = jnp.tanh(h.astype(tanh_dtype)).astype(compute_dtype)

    # layer 2: block-diagonal [aw2 | cw2], zero-padded -> (TB, 128)
    h = jnp.dot(h, w2_ref[...], preferred_element_type=jnp.float32) + b2_ref[...]
    h = jnp.tanh(h.astype(tanh_dtype)).astype(compute_dtype)

    # layer 3: block-diagonal [aw3 | cw3], zero-padded -> (TB, 128)
    # lanes [0, n_action) = actor logits, lane n_action = critic value, rest = 0
    z = jnp.dot(h, w3_ref[...], preferred_element_type=jnp.float32) + b3_ref[...]

    lane = jax.lax.broadcasted_iota(jnp.int32, z.shape, dimension=1)
    act_mask = lane < n_action

    # PyTorch:  F.softmax(th.exp(logits), dim=-1); padded lanes excluded.
    y = jnp.exp(jnp.where(act_mask, z, -jnp.inf))               # = th.exp(logits); 0 on pads
    m = jnp.max(y, axis=-1, keepdims=True)
    e = jnp.where(act_mask, jnp.exp(y - m), 0.0)
    s = jnp.sum(e, axis=-1, keepdims=True)
    pi = e * pl.reciprocal(s, approx=True)

    # single unmasked full-lane store: pi on actor lanes, raw z elsewhere
    # (lane n_action carries the critic value; padded lanes carry 0).
    out_ref[...] = jnp.where(act_mask, pi, z)


# --------------------------------------------------------------------------
# parameter packing (actor/critic fusion, lane padding to 128, bf16 weights)
# --------------------------------------------------------------------------
def pack_params(p, compute_dtype=jnp.bfloat16, lane=128):
    obs = p["aw1"].shape[0]
    hid = p["aw2"].shape[0]
    n_action = p["aw3"].shape[1]
    fused = 2 * hid
    h_pad = _round_up(fused, lane)                 # padded hidden width (128)
    o_pad = _round_up(n_action + 1, lane)          # padded output width (128)

    # layer 1: concat along output axis, zero-pad lanes
    w1 = jnp.zeros((obs, h_pad), jnp.float32)
    w1 = w1.at[:, :hid].set(p["aw1"]).at[:, hid:fused].set(p["cw1"])
    b1 = jnp.zeros((1, h_pad), jnp.float32)
    b1 = b1.at[:, :hid].set(p["ab1"]).at[:, hid:fused].set(p["cb1"])

    # layer 2: block-diagonal, zero-padded (pad bias 0 -> tanh(0)=0 stays inert)
    w2 = jnp.zeros((h_pad, h_pad), jnp.float32)
    w2 = w2.at[:hid, :hid].set(p["aw2"]).at[hid:fused, hid:fused].set(p["cw2"])
    b2 = jnp.zeros((1, h_pad), jnp.float32)
    b2 = b2.at[:, :hid].set(p["ab2"]).at[:, hid:fused].set(p["cb2"])

    # layer 3: block-diagonal -> lanes [0,NACT)=logits, lane NACT=value, rest 0
    w3 = jnp.zeros((h_pad, o_pad), jnp.float32)
    w3 = w3.at[:hid, :n_action].set(p["aw3"])
    w3 = w3.at[hid:fused, n_action:n_action + 1].set(p["cw3"])
    b3 = jnp.zeros((1, o_pad), jnp.float32)
    b3 = b3.at[:, :n_action].set(p["ab3"])
    b3 = b3.at[:, n_action:n_action + 1].set(p["cb3"])

    return dict(
        w1=w1.astype(compute_dtype), b1=b1,        # biases stay f32 (f32 accum)
        w2=w2.astype(compute_dtype), b2=b2,
        w3=w3.astype(compute_dtype), b3=b3,
        n_action=int(n_action),
    )


# --------------------------------------------------------------------------
# wrapper
# --------------------------------------------------------------------------
def policy_forward(x, packed, *, num_tc=None, max_tile_rows=4096,
                   compute_dtype=jnp.bfloat16, tanh_dtype=None):
    """MLPBase.forward (actor distribution + critic value) in one Pallas call."""
    if num_tc is None:
        num_tc = _num_tensorcores()
    if tanh_dtype is None:
        tanh_dtype = _default_tanh_dtype()

    B, obs = x.shape
    n_action = packed["n_action"]
    n_pad = packed["w3"].shape[1]                  # lane-padded output width (128)

    # One grid step per TensorCore (per-step overhead dominates this tiny
    # kernel); cap tile rows so the (tb,128) f32 tiles + intermediates fit the
    # 32 MiB scoped VMEM on every generation (incl. v7x's 64 MiB physical).
    tb = _round_up(pl.cdiv(B, num_tc), 8)
    tb = min(tb, max_tile_rows)
    b_pad = _round_up(B, tb)
    if b_pad != B:
        x = jnp.pad(x, ((0, b_pad - B), (0, 0)))
    grid = (b_pad // tb,)

    def resident(arr):   # weights/biases: same block every step -> stay in VMEM
        return pl.BlockSpec(arr.shape, lambda i: (0, 0))

    out = pl.pallas_call(
        functools.partial(_policy_kernel, n_action=n_action,
                          compute_dtype=compute_dtype, tanh_dtype=tanh_dtype),
        out_shape=jax.ShapeDtypeStruct((b_pad, n_pad), jnp.float32),
        grid=grid,
        in_specs=[
            pl.BlockSpec((tb, obs), lambda i: (i, 0)),          # x streamed over batch
            resident(packed["w1"]), resident(packed["b1"]),
            resident(packed["w2"]), resident(packed["b2"]),
            resident(packed["w3"]), resident(packed["b3"]),
        ],
        out_specs=pl.BlockSpec((tb, n_pad), lambda i: (i, 0)),
        compiler_params=pltpu.CompilerParams(
            dimension_semantics=("parallel",),                  # 2 TCs on v7x
            vmem_limit_bytes=32 * 1024 * 1024,                  # safe on v5e/v6e/v7x
        ),
    )(x, packed["w1"], packed["b1"], packed["w2"], packed["b2"],
      packed["w3"], packed["b3"])

    pi = out[:B, :n_action]
    value = out[:B, n_action:n_action + 1]
    return pi, value


# --------------------------------------------------------------------------
# synthetic parameters + references
# --------------------------------------------------------------------------
def init_params(key, obs_dim, hidden_dim, n_action):
    """Deterministic synthetic parameters; weights stored as (in, out)."""
    ks = jax.random.split(key, 6)

    def linear(k, fan_in, fan_out):
        w = jax.random.normal(k, (fan_in, fan_out), jnp.float32) / jnp.sqrt(fan_in)
        b = jnp.zeros((1, fan_out), jnp.float32)
        return w, b

    aw1, ab1 = linear(ks[0], obs_dim, hidden_dim)
    aw2, ab2 = linear(ks[1], hidden_dim, hidden_dim)
    aw3, ab3 = linear(ks[2], hidden_dim, n_action)
    cw1, cb1 = linear(ks[3], obs_dim, hidden_dim)
    cw2, cb2 = linear(ks[4], hidden_dim, hidden_dim)
    cw3, cb3 = linear(ks[5], hidden_dim, 1)
    return dict(aw1=aw1, ab1=ab1, aw2=aw2, ab2=ab2, aw3=aw3, ab3=ab3,
                cw1=cw1, cb1=cb1, cw2=cw2, cb2=cb2, cw3=cw3, cb3=cb3)


def reference_forward(x, p, matmul_dtype=jnp.float32, tanh_dtype=jnp.float32):
    """Plain-JAX reference.  With matmul_dtype=bf16 / tanh_dtype matching the
    kernel it mimics the kernel's precision flow so the comparison is tight."""
    def lin(h, w, b):
        return jnp.dot(h.astype(matmul_dtype), w.astype(matmul_dtype),
                       preferred_element_type=jnp.float32) + b

    def act(h):
        return jnp.tanh(h.astype(tanh_dtype)).astype(jnp.float32)

    a = act(lin(x, p["aw1"], p["ab1"]))
    a = act(lin(a, p["aw2"], p["ab2"]))
    pi = jax.nn.softmax(jnp.exp(lin(a, p["aw3"], p["ab3"])), axis=-1)
    c = act(lin(x, p["cw1"], p["cb1"]))
    c = act(lin(c, p["cw2"], p["cb2"]))
    v = lin(c, p["cw3"], p["cb3"])
    return pi, v


# --------------------------------------------------------------------------
if __name__ == "__main__":
    # param_set equivalent: obs_shape=(32,), hidden_dim=32, n_action=8, rnn=False
    OBS, HID, NACT = 32, 32, 8

    key = jax.random.PRNGKey(0)
    k_obs, k_obs2, k_par = jax.random.split(key, 3)
    params = init_params(k_par, OBS, HID, NACT)
    packed = pack_params(params, compute_dtype=jnp.bfloat16)

    tanh_dtype = _default_tanh_dtype()

    for B, kk in ((4, k_obs), (1000, k_obs2)):
        obs = jax.random.normal(kk, (B, OBS), jnp.float32)

        pi, value = jax.block_until_ready(policy_forward(obs, packed))
        assert pi.shape == (B, NACT) and value.shape == (B, 1)

        # matched reference (same bf16 matmul / tanh dtype flow as the kernel);
        # tolerance absorbs pl.reciprocal(approx=True) and tanh ulp differences.
        pi_m, v_m = reference_forward(obs, params, matmul_dtype=jnp.bfloat16,
                                      tanh_dtype=tanh_dtype)
        assert jnp.allclose(pi, pi_m, atol=1e-2, rtol=1e-2)
        assert jnp.allclose(value, v_m, atol=1e-2, rtol=1e-2)

        # loose sanity check vs pure-f32 reference
        pi_f, v_f = reference_forward(obs, params)
        assert jnp.allclose(pi, pi_f, atol=5e-2, rtol=5e-2)
        assert jnp.allclose(value, v_f, atol=5e-2, rtol=5e-2)

        assert jnp.allclose(jnp.sum(pi, axis=-1), 1.0, atol=5e-3)
        assert bool(jnp.all(jnp.isfinite(pi))) and bool(jnp.all(jnp.isfinite(value)))

        # multi-tile path (grid=2, as used for v7x megacore) must agree
        pi2, v2 = jax.block_until_ready(policy_forward(obs, packed, num_tc=2))
        assert jnp.allclose(pi, pi2, atol=1e-6, rtol=1e-6)
        assert jnp.allclose(value, v2, atol=1e-6, rtol=1e-6)

    print("KERNEL_OK")
</pallas_src>

<mosaic_0001>
module attributes {stable_mosaic.version = 11 : i64} {
  func.func @_policy_kernel(%arg0: i32, %arg1: memref<8x32xf32, #tpu.memory_space<vmem>>, %arg2: memref<32x128xbf16, #tpu.memory_space<vmem>>, %arg3: memref<1x128xf32, #tpu.memory_space<vmem>>, %arg4: memref<128x128xbf16, #tpu.memory_space<vmem>>, %arg5: memref<1x128xf32, #tpu.memory_space<vmem>>, %arg6: memref<128x128xbf16, #tpu.memory_space<vmem>>, %arg7: memref<1x128xf32, #tpu.memory_space<vmem>>, %arg8: memref<8x128xf32, #tpu.memory_space<vmem>>) attributes {dimension_semantics = [#tpu.dimension_semantics<parallel>], iteration_bounds = array<i64: 1>, scalar_prefetch = 0 : i64, scratch_operands = 0 : i64, tpu.core_type = #tpu.core_type<tc>, window_params = [{transform_indices = @transform_0, window_bounds = array<i64: 8, 32>}, {pipeline_mode = #tpu.pipeline_mode<synchronous>, transform_indices = @transform_1, window_bounds = array<i64: 32, 128>}, {pipeline_mode = #tpu.pipeline_mode<synchronous>, transform_indices = @transform_2, window_bounds = array<i64: 1, 128>}, {pipeline_mode = #tpu.pipeline_mode<synchronous>, transform_indices = @transform_3, window_bounds = array<i64: 128, 128>}, {pipeline_mode = #tpu.pipeline_mode<synchronous>, transform_indices = @transform_4, window_bounds = array<i64: 1, 128>}, {pipeline_mode = #tpu.pipeline_mode<synchronous>, transform_indices = @transform_5, window_bounds = array<i64: 128, 128>}, {pipeline_mode = #tpu.pipeline_mode<synchronous>, transform_indices = @transform_6, window_bounds = array<i64: 1, 128>}, {transform_indices = @transform_7, window_bounds = array<i64: 8, 128>}]} {
    %c0 = arith.constant 0 : index
    %c0_0 = arith.constant 0 : index
    %0 = vector.load %arg1[%c0, %c0_0] : memref<8x32xf32, #tpu.memory_space<vmem>>, vector<8x32xf32>
    %1 = arith.truncf %0 : vector<8x32xf32> to vector<8x32xbf16>
    %c0_1 = arith.constant 0 : index
    %c0_2 = arith.constant 0 : index
    %2 = vector.load %arg2[%c0_1, %c0_2] : memref<32x128xbf16, #tpu.memory_space<vmem>>, vector<32x128xbf16>
    %cst = arith.constant dense<0.000000e+00> : vector<8x128xf32>
    %3 = tpu.matmul %1, %2, %cst {dimension_numbers = #tpu.dot_dimension_numbers<[1], [0], [0], [1], [0, 0, 1, 1], [], []>} : vector<8x32xbf16>, vector<32x128xbf16>, vector<8x128xf32> -> vector<8x128xf32>
    %c0_3 = arith.constant 0 : index
    %c0_4 = arith.constant 0 : index
    %4 = vector.load %arg3[%c0_3, %c0_4] : memref<1x128xf32, #tpu.memory_space<vmem>>, vector<1x128xf32>
    %5 = vector.broadcast %4 : vector<1x128xf32> to vector<8x128xf32>
    %6 = arith.addf %3, %5 : vector<8x128xf32>
    %7 = arith.truncf %6 : vector<8x128xf32> to vector<8x128xbf16>
    %8 = math.tanh %7 : vector<8x128xbf16>
    %c0_5 = arith.constant 0 : index
    %c0_6 = arith.constant 0 : index
    %9 = vector.load %arg4[%c0_5, %c0_6] : memref<128x128xbf16, #tpu.memory_space<vmem>>, vector<128x128xbf16>
    %cst_7 = arith.constant dense<0.000000e+00> : vector<8x128xf32>
    %10 = tpu.matmul %8, %9, %cst_7 {dimension_numbers = #tpu.dot_dimension_numbers<[1], [0], [0], [1], [0, 0, 1, 1], [], []>} : vector<8x128xbf16>, vector<128x128xbf16>, vector<8x128xf32> -> vector<8x128xf32>
    %c0_8 = arith.constant 0 : index
    %c0_9 = arith.constant 0 : index
    %11 = vector.load %arg5[%c0_8, %c0_9] : memref<1x128xf32, #tpu.memory_space<vmem>>, vector<1x128xf32>
    %12 = vector.broadcast %11 : vector<1x128xf32> to vector<8x128xf32>
    %13 = arith.addf %10, %12 : vector<8x128xf32>
    %14 = arith.truncf %13 : vector<8x128xf32> to vector<8x128xbf16>
    %15 = math.tanh %14 : vector<8x128xbf16>
    %c0_10 = arith.constant 0 : index
    %c0_11 = arith.constant 0 : index
    %16 = vector.load %arg6[%c0_10, %c0_11] : memref<128x128xbf16, #tpu.memory_space<vmem>>, vector<128x128xbf16>
    %cst_12 = arith.constant dense<0.000000e+00> : vector<8x128xf32>
    %17 = tpu.matmul %15, %16, %cst_12 {dimension_numbers = #tpu.dot_dimension_numbers<[1], [0], [0], [1], [0, 0, 1, 1], [], []>} : vector<8x128xbf16>, vector<128x128xbf16>, vector<8x128xf32> -> vector<8x128xf32>
    %c0_13 = arith.constant 0 : index
    %c0_14 = arith.constant 0 : index
    %18 = vector.load %arg7[%c0_13, %c0_14] : memref<1x128xf32, #tpu.memory_space<vmem>>, vector<1x128xf32>
    %19 = vector.broadcast %18 : vector<1x128xf32> to vector<8x128xf32>
    %20 = arith.addf %17, %19 : vector<8x128xf32>
    %21 = tpu.iota {dimensions = array<i32: 1>} : vector<8x128xi32>
    %c8_i32 = arith.constant 8 : i32
    %22 = vector.broadcast %c8_i32 : i32 to vector<8x128xi32>
    %23 = arith.cmpi slt, %21, %22 : vector<8x128xi32>
    %cst_15 = arith.constant 0xFF800000 : f32
    %24 = vector.broadcast %cst_15 : f32 to vector<8x128xf32>
    %25 = arith.select %23, %20, %24 : vector<8x128xi1>, vector<8x128xf32>
    %26 = math.exp %25 : vector<8x128xf32>
    %cst_16 = arith.constant dense<0xFF800000> : vector<8xf32>
    %27 = vector.multi_reduction <maximumf>, %26, %cst_16 [1] : vector<8x128xf32> to vector<8xf32>
    %28 = vector.shape_cast %27 : vector<8xf32> to vector<8x1xf32>
    %29 = vector.broadcast %28 : vector<8x1xf32> to vector<8x128xf32>
    %30 = arith.subf %26, %29 : vector<8x128xf32>
    %31 = math.exp %30 : vector<8x128xf32>
    %cst_17 = arith.constant 0.000000e+00 : f32
    %32 = vector.broadcast %cst_17 : f32 to vector<8x128xf32>
    %33 = arith.select %23, %31, %32 : vector<8x128xi1>, vector<8x128xf32>
    %cst_18 = arith.constant dense<0.000000e+00> : vector<8xf32>
    %34 = vector.multi_reduction <add>, %33, %cst_18 [1] : vector<8x128xf32> to vector<8xf32>
    %35 = vector.shape_cast %34 : vector<8xf32> to vector<8x1xf32>
    %36 = tpu.reciprocal %35 {approx = true} : vector<8x1xf32> -> vector<8x1xf32>
    %37 = vector.broadcast %36 : vector<8x1xf32> to vector<8x128xf32>
    %38 = arith.mulf %33, %37 : vector<8x128xf32>
    %39 = arith.select %23, %38, %20 : vector<8x128xi1>, vector<8x128xf32>
    %c0_19 = arith.constant 0 : index
    %c0_20 = arith.constant 0 : index
    %40 = vector.load %arg8[%c0_19, %c0_20] : memref<8x128xf32, #tpu.memory_space<vmem>>, vector<8x128xf32>
    tpu.vector_store %arg8[%c0_19, %c0_20], %39 {strides = array<i32>} : memref<8x128xf32, #tpu.memory_space<vmem>>, vector<8x128xf32>,
    return
  }
  func.func @transform_0(%arg0: i32) -> (i32, i32) {
    %c0_i32 = arith.constant 0 : i32
    %c0_i32_0 = arith.constant 0 : i32
    return %arg0, %c0_i32 : i32, i32
  }
  func.func @transform_1(%arg0: i32) -> (i32, i32) {
    %c0_i32 = arith.constant 0 : i32
    %c0_i32_0 = arith.constant 0 : i32
    %c0_i32_1 = arith.constant 0 : i32
    return %c0_i32, %c0_i32_0 : i32, i32
  }
  func.func @transform_2(%arg0: i32) -> (i32, i32) {
    %c0_i32 = arith.constant 0 : i32
    %c0_i32_0 = arith.constant 0 : i32
    %c0_i32_1 = arith.constant 0 : i32
    return %c0_i32, %c0_i32_0 : i32, i32
  }
  func.func @transform_3(%arg0: i32) -> (i32, i32) {
    %c0_i32 = arith.constant 0 : i32
    %c0_i32_0 = arith.constant 0 : i32
    %c0_i32_1 = arith.constant 0 : i32
    return %c0_i32, %c0_i32_0 : i32, i32
  }
  func.func @transform_4(%arg0: i32) -> (i32, i32) {
    %c0_i32 = arith.constant 0 : i32
    %c0_i32_0 = arith.constant 0 : i32
    %c0_i32_1 = arith.constant 0 : i32
    return %c0_i32, %c0_i32_0 : i32, i32
  }
  func.func @transform_5(%arg0: i32) -> (i32, i32) {
    %c0_i32 = arith.constant 0 : i32
    %c0_i32_0 = arith.constant 0 : i32
    %c0_i32_1 = arith.constant 0 : i32
    return %c0_i32, %c0_i32_0 : i32, i32
  }
  func.func @transform_6(%arg0: i32) -> (i32, i32) {
    %c0_i32 = arith.constant 0 : i32
    %c0_i32_0 = arith.constant 0 : i32
    %c0_i32_1 = arith.constant 0 : i32
    return %c0_i32, %c0_i32_0 : i32, i32
  }
  func.func @transform_7(%arg0: i32) -> (i32, i32) {
    %c0_i32 = arith.constant 0 : i32
    %c0_i32_0 = arith.constant 0 : i32
    return %arg0, %c0_i32 : i32, i32
  }
}

</mosaic_0001>

<llo_original>
// kernel: tpu_custom_call.1
$region0: #{tpu_custom_call.1}
  #allocation0 [shape = 'u32[]', space=smem, size = 0x4, offset = 0x4, fixed_abs, tag = 'smem constant byte address 0x4 - core index']
  #allocation1 [shape = 'u32[72,128]{1,0:T(1,128)}', space=vmem, size = 0x9000, scoped, tag = 'internal scratch']
  %s0 = inlined_call_operand.hbm [shape: f32[8,32], index: 0, kind: input, shape index: {}]
  %s1 = inlined_call_operand.hbm [shape: bf16[32,128], index: 1, kind: input, shape index: {}]
  %s2 = inlined_call_operand.vmem [shape: f32[1,128], index: 2, kind: input, shape index: {}]
  %s3 = inlined_call_operand.hbm [shape: bf16[128,128], index: 3, kind: input, shape index: {}]
  %s4 = inlined_call_operand.vmem [shape: f32[1,128], index: 4, kind: input, shape index: {}]
  %s5 = inlined_call_operand.hbm [shape: bf16[128,128], index: 5, kind: input, shape index: {}]
  %s6 = inlined_call_operand.vmem [shape: f32[1,128], index: 6, kind: input, shape index: {}]
  %s7 = inlined_call_operand.hbm [shape: f32[8,128], index: 7, kind: output, shape index: {}]
  %s8 = sld [smem:[#allocation0]]
  $region54: #{tpu_custom_call.1} parent=0
    _
  %s10 = ssub.s32 1, %s8
  %s11 = scalar_select 0, %s10, %s8
  $region1: #{tpu_custom_call.1} parent=0
    #allocation2 [shape = 'u8[4096]{0}', space=vmem, size = 0x1000, scoped, tag = 'input window, operand 0, single buffered']
    #allocation3 [shape = 's32[1]{0}', space=sflag, size = 0x4, scoped, tag = 'scoped memory for tpu_custom_call.1']
    #allocation4 [shape = 's32[1]{0}', space=sflag, size = 0x4, scoped, tag = 'scoped memory for tpu_custom_call.1']
    #allocation5 [shape = 'u8[8192]{0}', space=vmem, size = 0x2000, scoped, tag = 'input window, operand 1, single buffered']
    #allocation6 [shape = 's32[1]{0}', space=sflag, size = 0x4, scoped, tag = 'scoped memory for tpu_custom_call.1']
    #allocation7 [shape = 'u8[32768]{0}', space=vmem, size = 0x8000, scoped, tag = 'input window, operand 3, single buffered']
    #allocation8 [shape = 'u8[32768]{0}', space=vmem, size = 0x8000, scoped, tag = 'input window, operand 5, single buffered']
    #allocation9 [shape = 's32[1]{0}', space=sflag, size = 0x4, scoped, tag = 'scoped memory for tpu_custom_call.1']
    #allocation10 [shape = 'u8[4096]{0}', space=vmem, size = 0x1000, scoped, tag = 'output window, operand 0, single buffered']
    %12 = vsyncpa [#allocation3], 0
    %13 = vsyncpa [#allocation6], 0
    %14 = vsyncpa [#allocation9], 0
    %15 = vsyncpa [#allocation4], 0
    // Predicated region
    $region2: #{tpu_custom_call.1} parent=1 // pred_check
      _
    $region3: #{tpu_custom_call.1} parent=1 // pred_check_branch
      %17 = sbr.rel (0) target = $region5
    $region4: #{tpu_custom_call.1} parent=1 // pred_region
      %19 = vsyncadd [#allocation3], 0
      %s21 = sshll.u32 %s0, 4
      %s22 = int_to_ptr.hbm [resolvable:$true] %s21
      %s23 = sshll.u32 [#allocation2], 4
      %s24 = int_to_ptr.vmem [resolvable:$true] %s23
      %26 = dma.hbm_to_vmem [thread:$0]  %s22, 128, %s24, [#allocation3]
    $region5: #{tpu_custom_call.1} parent=1 // pred_fallthru
      _
    // Predicated region
    $region6: #{tpu_custom_call.1} parent=1 // pred_check
      _
    $region7: #{tpu_custom_call.1} parent=1 // pred_check_branch
      %28 = sbr.rel (0) target = $region9
    $region8: #{tpu_custom_call.1} parent=1 // pred_region
      %30 = vsyncadd [#allocation6], 0
      %s31 = sshll.u32 %s1, 4
      %s32 = int_to_ptr.hbm [resolvable:$true] %s31
      %s33 = sshll.u32 [#allocation5], 4
      %s34 = int_to_ptr.vmem [resolvable:$true] %s33
      %39 = dma.hbm_to_vmem [thread:$0]  %s32, 256, %s34, [#allocation6], 64, 64, 4
    $region9: #{tpu_custom_call.1} parent=1 // pred_fallthru
      _
    // Predicated region
    $region10: #{tpu_custom_call.1} parent=1 // pred_check
      _
    $region11: #{tpu_custom_call.1} parent=1 // pred_check_branch
      %41 = sbr.rel (0) target = $region13
    $region12: #{tpu_custom_call.1} parent=1 // pred_region
      _
    $region13: #{tpu_custom_call.1} parent=1 // pred_fallthru
      _
    // Predicated region
    $region14: #{tpu_custom_call.1} parent=1 // pred_check
      _
    $region15: #{tpu_custom_call.1} parent=1 // pred_check_branch
      %43 = sbr.rel (0) target = $region17
    $region16: #{tpu_custom_call.1} parent=1 // pred_region
      %45 = vsyncadd [#allocation6], 0
      %s46 = sshll.u32 %s3, 4
      %s47 = int_to_ptr.hbm [resolvable:$true] %s46
      %s48 = sshll.u32 [#allocation7], 4
      %s49 = int_to_ptr.vmem [resolvable:$true] %s48
      %54 = dma.hbm_to_vmem [thread:$0]  %s47, 1024, %s49, [#allocation6], 64, 64, 4
    $region17: #{tpu_custom_call.1} parent=1 // pred_fallthru
      _
    // Predicated region
    $region18: #{tpu_custom_call.1} parent=1 // pred_check
      _
    $region19: #{tpu_custom_call.1} parent=1 // pred_check_branch
      %56 = sbr.rel (0) target = $region21
    $region20: #{tpu_custom_call.1} parent=1 // pred_region
      _
    $region21: #{tpu_custom_call.1} parent=1 // pred_fallthru
      _
    // Predicated region
    $region22: #{tpu_custom_call.1} parent=1 // pred_check
      _
    $region23: #{tpu_custom_call.1} parent=1 // pred_check_branch
      %58 = sbr.rel (0) target = $region25
    $region24: #{tpu_custom_call.1} parent=1 // pred_region
      %60 = vsyncadd [#allocation9], 0
      %s61 = sshll.u32 %s5, 4
      %s62 = int_to_ptr.hbm [resolvable:$true] %s61
      %s63 = sshll.u32 [#allocation8], 4
      %s64 = int_to_ptr.vmem [resolvable:$true] %s63
      %69 = dma.hbm_to_vmem [thread:$0]  %s62, 1024, %s64, [#allocation9], 64, 64, 4
    $region25: #{tpu_custom_call.1} parent=1 // pred_fallthru
      _
    // Predicated region
    $region26: #{tpu_custom_call.1} parent=1 // pred_check
      _
    $region27: #{tpu_custom_call.1} parent=1 // pred_check_branch
      %71 = sbr.rel (0) target = $region29
    $region28: #{tpu_custom_call.1} parent=1 // pred_region
      _
    $region29: #{tpu_custom_call.1} parent=1 // pred_fallthru
      _
    // Predicated region
    $region30: #{tpu_custom_call.1} parent=1 // pred_check
      _
    $region31: #{tpu_custom_call.1} parent=1 // pred_check_branch
      %73 = sbr.rel (0) target = $region33
    $region32: #{tpu_custom_call.1} parent=1 // pred_region
      %75 = dma.done [#allocation3], 128
    $region33: #{tpu_custom_call.1} parent=1 // pred_fallthru
      _
    // Predicated region
    $region34: #{tpu_custom_call.1} parent=1 // pred_check
      _
    $region35: #{tpu_custom_call.1} parent=1 // pred_check_branch
      %77 = sbr.rel (0) target = $region37
    $region36: #{tpu_custom_call.1} parent=1 // pred_region
      %79 = dma.done [#allocation6], 256
    $region37: #{tpu_custom_call.1} parent=1 // pred_fallthru
      _
    // Predicated region
    $region38: #{tpu_custom_call.1} parent=1 // pred_check
      _
    $region39: #{tpu_custom_call.1} parent=1 // pred_check_branch
      %81 = sbr.rel (0) target = $region41
    $region40: #{tpu_custom_call.1} parent=1 // pred_region
      %83 = dma.done [#allocation6], 1024
    $region41: #{tpu_custom_call.1} parent=1 // pred_fallthru
      _
    // Predicated region
    $region42: #{tpu_custom_call.1} parent=1 // pred_check
      _
    $region43: #{tpu_custom_call.1} parent=1 // pred_check_branch
      %85 = sbr.rel (0) target = $region45
    $region44: #{tpu_custom_call.1} parent=1 // pred_region
      %87 = dma.done [#allocation9], 1024
    $region45: #{tpu_custom_call.1} parent=1 // pred_fallthru
      _
    %v89 = vld [vmem:[#allocation2] sm:$0xff]
    %v90 = vpack.c.bf16 %v89, %v89
    %v91 = vld [vmem:[#allocation5] sm:$0xf]
    %v92 = vld [vmem:[#allocation5 + $0x4] sm:$0xf]
    %v93 = vld [vmem:[#allocation5 + $0x8] sm:$0xf]
    %v94 = vld [vmem:[#allocation5 + $0xc] sm:$0xf]
    %v95 = vld [vmem:[%s2] sm:$0x1]
    %v97 = vperm.slane %v95, 0
    %v103 = vunpack.c.l.b16 %v91
    %v104 = vunpack.c.l.b16 %v92
    %v105 = vunpack.c.l.b16 %v93
    %v106 = vunpack.c.l.b16 %v94
    %v107 = vpack.c.b16 %v104, %v103
    %v108 = vpack.c.b16 %v106, %v105
    %vm111 = vcmask 261120
    %v113 = vsel %vm111, %v90, 0
    %115 = vmatpush.bf16.msra.mxu0 0
    %116 = vmatpush.bf16.msra.mxu0 0
    %117 = vmatpush.bf16.msra.mxu0 0
    %118 = vmatpush.bf16.msra.mxu0 0
    %119 = vmatpush.bf16.msra.mxu0 0
    %120 = vmatpush.bf16.msra.mxu0 0
    %121 = vmatpush.bf16.msra.mxu0 %v108
    %122 = vmatpush.bf16.msra.mxu0 %v107
    %123 = vmatmul.bf16.gmra.mxu0 %v113
    %v124 = vpop.f32.mrf.mxu0
    %v125 = vadd.f32 %v97, %v124
    %v126 = vpop.f32.mrf.mxu0
    %127 = vdwg.mxu0
    %v128 = vpack.c.bf16 %v125, %v125
    %v129 = vunpack.c.l.bf16 %v128
    %v130 = vtanh.pop %v129
    %v131 = vpack.c.bf16 %v130, %v130
    %v132 = vld [vmem:[#allocation7] sm:$0xf]
    %v133 = vld [vmem:[#allocation7 + $0x4] sm:$0xf]
    %v134 = vld [vmem:[#allocation7 + $0x8] sm:$0xf]
    %v135 = vld [vmem:[#allocation7 + $0xc] sm:$0xf]
    %v136 = vld [vmem:[#allocation7 + $0x10] sm:$0xf]
    %v137 = vld [vmem:[#allocation7 + $0x14] sm:$0xf]
    %v138 = vld [vmem:[#allocation7 + $0x18] sm:$0xf]
    %v139 = vld [vmem:[#allocation7 + $0x1c] sm:$0xf]
    %v140 = vld [vmem:[#allocation7 + $0x20] sm:$0xf]
    %v141 = vld [vmem:[#allocation7 + $0x24] sm:$0xf]
    %v142 = vld [vmem:[#allocation7 + $0x28] sm:$0xf]
    %v143 = vld [vmem:[#allocation7 + $0x2c] sm:$0xf]
    %v144 = vld [vmem:[#allocation7 + $0x30] sm:$0xf]
    %v145 = vld [vmem:[#allocation7 + $0x34] sm:$0xf]
    %v146 = vld [vmem:[#allocation7 + $0x38] sm:$0xf]
    %v147 = vld [vmem:[#allocation7 + $0x3c] sm:$0xf]
    %v148 = vld [vmem:[%s4] sm:$0x1]
    %v150 = vperm.slane %v148, 0
    %v168 = vunpack.c.l.b16 %v132
    %v169 = vunpack.c.l.b16 %v133
    %v170 = vunpack.c.l.b16 %v134
    %v171 = vunpack.c.l.b16 %v135
    %v172 = vunpack.c.l.b16 %v136
    %v173 = vunpack.c.l.b16 %v137
    %v174 = vunpack.c.l.b16 %v138
    %v175 = vunpack.c.l.b16 %v139
    %v176 = vunpack.c.l.b16 %v140
    %v177 = vunpack.c.l.b16 %v141
    %v178 = vunpack.c.l.b16 %v142
    %v179 = vunpack.c.l.b16 %v143
    %v180 = vunpack.c.l.b16 %v144
    %v181 = vunpack.c.l.b16 %v145
    %v182 = vunpack.c.l.b16 %v146
    %v183 = vunpack.c.l.b16 %v147
    %v184 = vpack.c.b16 %v169, %v168
    %v185 = vpack.c.b16 %v171, %v170
    %v186 = vpack.c.b16 %v173, %v172
    %v187 = vpack.c.b16 %v175, %v174
    %v188 = vpack.c.b16 %v177, %v176
    %v189 = vpack.c.b16 %v179, %v178
    %v190 = vpack.c.b16 %v181, %v180
    %v191 = vpack.c.b16 %v183, %v182
    %200 = vmatpush.bf16.msra.mxu0 %v191
    %201 = vmatpush.bf16.msra.mxu0 %v190
    %202 = vmatpush.bf16.msra.mxu0 %v189
    %203 = vmatpush.bf16.msra.mxu0 %v188
    %204 = vmatpush.bf16.msra.mxu0 %v187
    %205 = vmatpush.bf16.msra.mxu0 %v186
    %206 = vmatpush.bf16.msra.mxu0 %v185
    %207 = vmatpush.bf16.msra.mxu0 %v184
    %208 = vmatmul.bf16.gmra.mxu0 %v131
    %v209 = vpop.f32.mrf.mxu0
    %v210 = vadd.f32 %v150, %v209
    %v211 = vpop.f32.mrf.mxu0
    %212 = vdwg.mxu0
    %v213 = vpack.c.bf16 %v210, %v210
    %v214 = vunpack.c.l.bf16 %v213
    %v215 = vtanh.pop %v214
    %v216 = vpack.c.bf16 %v215, %v215
    %v217 = vld [vmem:[#allocation8] sm:$0xf]
    %v218 = vld [vmem:[#allocation8 + $0x4] sm:$0xf]
    %v219 = vld [vmem:[#allocation8 + $0x8] sm:$0xf]
    %v220 = vld [vmem:[#allocation8 + $0xc] sm:$0xf]
    %v221 = vld [vmem:[#allocation8 + $0x10] sm:$0xf]
    %v222 = vld [vmem:[#allocation8 + $0x14] sm:$0xf]
    %v223 = vld [vmem:[#allocation8 + $0x18] sm:$0xf]
    %v224 = vld [vmem:[#allocation8 + $0x1c] sm:$0xf]
    %v225 = vld [vmem:[#allocation8 + $0x20] sm:$0xf]
    %v226 = vld [vmem:[#allocation8 + $0x24] sm:$0xf]
    %v227 = vld [vmem:[#allocation8 + $0x28] sm:$0xf]
    %v228 = vld [vmem:[#allocation8 + $0x2c] sm:$0xf]
    %v229 = vld [vmem:[#allocation8 + $0x30] sm:$0xf]
    %v230 = vld [vmem:[#allocation8 + $0x34] sm:$0xf]
    %v231 = vld [vmem:[#allocation8 + $0x38] sm:$0xf]
    %v232 = vld [vmem:[#allocation8 + $0x3c] sm:$0xf]
    %v233 = vld [vmem:[%s6] sm:$0x1]
    %v235 = vperm.slane %v233, 0
    %v253 = vunpack.c.l.b16 %v217
    %v254 = vunpack.c.l.b16 %v218
    %v255 = vunpack.c.l.b16 %v219
    %v256 = vunpack.c.l.b16 %v220
    %v257 = vunpack.c.l.b16 %v221
    %v258 = vunpack.c.l.b16 %v222
    %v259 = vunpack.c.l.b16 %v223
    %v260 = vunpack.c.l.b16 %v224
    %v261 = vunpack.c.l.b16 %v225
    %v262 = vunpack.c.l.b16 %v226
    %v263 = vunpack.c.l.b16 %v227
    %v264 = vunpack.c.l.b16 %v228
    %v265 = vunpack.c.l.b16 %v229
    %v266 = vunpack.c.l.b16 %v230
    %v267 = vunpack.c.l.b16 %v231
    %v268 = vunpack.c.l.b16 %v232
    %v269 = vpack.c.b16 %v254, %v253
    %v270 = vpack.c.b16 %v256, %v255
    %v271 = vpack.c.b16 %v258, %v257
    %v272 = vpack.c.b16 %v260, %v259
    %v273 = vpack.c.b16 %v262, %v261
    %v274 = vpack.c.b16 %v264, %v263
    %v275 = vpack.c.b16 %v266, %v265
    %v276 = vpack.c.b16 %v268, %v267
    %285 = vmatpush.bf16.msra.mxu0 %v276
    %286 = vmatpush.bf16.msra.mxu0 %v275
    %287 = vmatpush.bf16.msra.mxu0 %v274
    %288 = vmatpush.bf16.msra.mxu0 %v273
    %289 = vmatpush.bf16.msra.mxu0 %v272
    %290 = vmatpush.bf16.msra.mxu0 %v271
    %291 = vmatpush.bf16.msra.mxu0 %v270
    %292 = vmatpush.bf16.msra.mxu0 %v269
    %293 = vmatmul.bf16.gmra.mxu0 %v216
    %v294 = vpop.f32.mrf.mxu0
    %v295 = vadd.f32 %v235, %v294
    %v296 = vpop.f32.mrf.mxu0
    %297 = vdwg.mxu0
    %v298 = vlaneseq
    %v299 = vand.u32 %v298, 127
    %vm300 = vcmp.lt.s32.totalorder %v299, 8
    %v301 = vsel %vm300, %v295, -inf
    %v302 = vmul.f32 %v301, 1.442695
    %v303 = vpow.pop %v302
    %304 = vmax.xlane.f32.xlu0 %v303
    %v305 = vpop.xlane.xlu0 %304
    %v306 = vsub.f32 %v303, %v305
    %v307 = vmul.f32 %v306, 1.442695
    %v308 = vpow.pop %v307
    %v309 = vsel %vm300, %v308, 0.0
    %310 = vadd.xlane.f32.xlu0 %v309
    %v311 = vpop.xlane.xlu0 %310
    %v312 = vrcp.pop %v311
    %v313 = vmul.f32 %v309, %v312
    %v314 = vsel %vm300, %v313, %v295
    %315 = vst [vmem:[#allocation10] sm:$0xff] %v314
    // Predicated region
    $region46: #{tpu_custom_call.1} parent=1 // pred_check
      _
    $region47: #{tpu_custom_call.1} parent=1 // pred_check_branch
      %317 = sbr.rel (0) target = $region49
    $region48: #{tpu_custom_call.1} parent=1 // pred_region
      %319 = vsyncadd [#allocation4], 0
      %s321 = sshll.u32 [#allocation10], 4
      %s322 = int_to_ptr.vmem [resolvable:$true] %s321
      %s323 = sshll.u32 %s7, 4
      %s324 = int_to_ptr.hbm [resolvable:$true] %s323
      %326 = dma.vmem_to_hbm [thread:$0]  %s322, 128, %s324, [#allocation4]
    $region49: #{tpu_custom_call.1} parent=1 // pred_fallthru
      _
    // Predicated region
    $region50: #{tpu_custom_call.1} parent=1 // pred_check
      _
    $region51: #{tpu_custom_call.1} parent=1 // pred_check_branch
      %328 = sbr.rel (0) target = $region53
    $region52: #{tpu_custom_call.1} parent=1 // pred_region
      %330 = dma.done [#allocation4], 128
    $region53: #{tpu_custom_call.1} parent=1 // pred_fallthru
      _
    %331 = vsyncpa [#allocation3], 1
    %332 = vsyncpa [#allocation6], 1
    %333 = vsyncpa [#allocation9], 1
    %334 = vsyncpa [#allocation4], 1

</llo_original>
